<compile_context>
chip_gen: v6e
topology: v6e:2x2x1
jax: 0.10.0
libtpu: 0.0.40
codegen_flags: <defaults>
</compile_context>

<pallas_src>
import jax
import jax.numpy as jnp
from jax.experimental import pallas as pl
from jax.experimental.pallas import tpu as pltpu

INPUT_DIM = 53
HIDDEN_DIM = 128
OUTPUT_DIM = INPUT_DIM

MAX_TB = 2048  # max batch-tile rows; ~3.8 MiB VMEM at this size


def _round_up(n: int, m: int) -> int:
    return ((n + m - 1) // m) * m


def _autoencoder_kernel(x_ref, w1_ref, b1_ref, w2_ref, b2_ref,
                        dec_ref, enc_ref):
    # Encoder: Linear(53 -> 128) + ReLU
    x = x_ref[...]                                                   # (TB, 53)
    h = jnp.dot(x, w1_ref[...], preferred_element_type=jnp.float32)  # (TB, 128)
    h = jnp.maximum(h + b1_ref[...], 0.0)
    enc_ref[...] = h.astype(enc_ref.dtype)

    # Decoder: Linear(128 -> 53) + Sigmoid
    y = jnp.dot(h, w2_ref[...], preferred_element_type=jnp.float32)  # (TB, 53)
    dec_ref[...] = jax.nn.sigmoid(y + b2_ref[...]).astype(dec_ref.dtype)


def autoencoder_forward(x, w1, b1, w2, b2):
    """x: (B, INPUT_DIM) f32.  Returns (decoded (B, OUTPUT_DIM), encoded (B, HIDDEN_DIM))."""
    B, D = x.shape
    assert D == INPUT_DIM and w1.shape == (INPUT_DIM, HIDDEN_DIM)
    assert w2.shape == (HIDDEN_DIM, OUTPUT_DIM)

    # --- batch tile selection --------------------------------------------
    B8 = _round_up(B, 8)
    if B8 <= MAX_TB:
        TB = B8                                   # single grid step
    else:
        n_steps = -(-B8 // MAX_TB)                # cdiv: keeps padding waste bounded
        TB = _round_up(-(-B8 // n_steps), 8)      # balanced, 8-aligned tiles
    B_pad = _round_up(B8, TB)

    # Only the batch dim is padded (zero rows, sliced away afterwards).
    x_p = x if B_pad == B else jnp.pad(x, ((0, B_pad - B), (0, 0)))  # (B_pad, 53)
    b1_2d = b1.reshape(1, HIDDEN_DIM)                                # (1, 128)
    b2_2d = b2.reshape(1, OUTPUT_DIM)                                # (1, 53)

    grid = (B_pad // TB,)

    cost = pl.CostEstimate(
        flops=2 * B_pad * (INPUT_DIM * HIDDEN_DIM + HIDDEN_DIM * OUTPUT_DIM),
        transcendentals=B_pad * OUTPUT_DIM,  # sigmoid exp per decoded element
        bytes_accessed=4 * (x_p.size + w1.size + w2.size + b1.size + b2.size
                            + B_pad * (HIDDEN_DIM + OUTPUT_DIM)),
    )

    dec_p, enc_p = pl.pallas_call(
        _autoencoder_kernel,
        out_shape=(
            jax.ShapeDtypeStruct((B_pad, OUTPUT_DIM), x.dtype),   # decoded
            jax.ShapeDtypeStruct((B_pad, HIDDEN_DIM), x.dtype),   # encoded
        ),
        grid=grid,
        in_specs=[
            # Streaming batch tiles of x (full 53-wide last dim).
            pl.BlockSpec((TB, INPUT_DIM), lambda i: (i, 0)),
            # Resident weights / biases: constant index_map, single-buffered.
            pl.BlockSpec((INPUT_DIM, HIDDEN_DIM), lambda i: (0, 0),
                         pipeline_mode=pl.Buffered(1)),
            pl.BlockSpec((1, HIDDEN_DIM), lambda i: (0, 0),
                         pipeline_mode=pl.Buffered(1)),
            pl.BlockSpec((HIDDEN_DIM, OUTPUT_DIM), lambda i: (0, 0),
                         pipeline_mode=pl.Buffered(1)),
            pl.BlockSpec((1, OUTPUT_DIM), lambda i: (0, 0),
                         pipeline_mode=pl.Buffered(1)),
        ],
        out_specs=(
            pl.BlockSpec((TB, OUTPUT_DIM), lambda i: (i, 0)),
            pl.BlockSpec((TB, HIDDEN_DIM), lambda i: (i, 0)),
        ),
        compiler_params=pltpu.CompilerParams(
            dimension_semantics=("parallel",),   # batch axis -> both TCs on v7x
        ),
        cost_estimate=cost,
    )(x_p, w1, b1_2d, w2, b2_2d)

    # Slice away batch padding only (no column padding anywhere).
    if B_pad != B:
        return dec_p[:B], enc_p[:B]
    return dec_p, enc_p


def init_params(key):
    """Deterministic init mimicking PyTorch nn.Linear default U[-1/sqrt(fan_in), 1/sqrt(fan_in)]."""
    k1, k2, k3, k4 = jax.random.split(key, 4)
    bound1 = 1.0 / jnp.sqrt(INPUT_DIM)
    bound2 = 1.0 / jnp.sqrt(HIDDEN_DIM)
    w1 = jax.random.uniform(k1, (INPUT_DIM, HIDDEN_DIM), jnp.float32, -bound1, bound1)
    b1 = jax.random.uniform(k2, (HIDDEN_DIM,), jnp.float32, -bound1, bound1)
    w2 = jax.random.uniform(k3, (HIDDEN_DIM, OUTPUT_DIM), jnp.float32, -bound2, bound2)
    b2 = jax.random.uniform(k4, (OUTPUT_DIM,), jnp.float32, -bound2, bound2)
    return w1, b1, w2, b2


if __name__ == "__main__":
    key = jax.random.PRNGKey(0)
    kx, kp = jax.random.split(key)

    w1, b1, w2, b2 = init_params(kp)
    fwd = jax.jit(autoencoder_forward)

    # Small batch (single grid step).
    B = 8
    x = jax.random.uniform(kx, (B, INPUT_DIM), jnp.float32)
    decoded, encoded = fwd(x, w1, b1, w2, b2)
    jax.block_until_ready((decoded, encoded))

    enc_ref = jnp.maximum(x @ w1 + b1, 0.0)
    dec_ref = jax.nn.sigmoid(enc_ref @ w2 + b2)
    assert decoded.shape == (B, OUTPUT_DIM) and encoded.shape == (B, HIDDEN_DIM)
    assert jnp.allclose(encoded, enc_ref, atol=1e-5, rtol=1e-5)
    assert jnp.allclose(decoded, dec_ref, atol=1e-5, rtol=1e-5)

    # Larger, non-tile-aligned batch to exercise the multi-step gridded path.
    B2 = 2500
    x2 = jax.random.uniform(jax.random.PRNGKey(7), (B2, INPUT_DIM), jnp.float32)
    dec2, enc2 = fwd(x2, w1, b1, w2, b2)
    jax.block_until_ready((dec2, enc2))
    enc2_ref = jnp.maximum(x2 @ w1 + b1, 0.0)
    dec2_ref = jax.nn.sigmoid(enc2_ref @ w2 + b2)
    assert jnp.allclose(enc2, enc2_ref, atol=1e-5, rtol=1e-5)
    assert jnp.allclose(dec2, dec2_ref, atol=1e-5, rtol=1e-5)

    print("KERNEL_OK")
</pallas_src>

<mosaic_0001>
module attributes {stable_mosaic.version = 11 : i64} {
  func.func @_autoencoder_kernel(%arg0: i32, %arg1: memref<8x53xf32, #tpu.memory_space<vmem>>, %arg2: memref<53x128xf32, #tpu.memory_space<vmem>>, %arg3: memref<1x128xf32, #tpu.memory_space<vmem>>, %arg4: memref<128x53xf32, #tpu.memory_space<vmem>>, %arg5: memref<1x53xf32, #tpu.memory_space<vmem>>, %arg6: memref<8x53xf32, #tpu.memory_space<vmem>>, %arg7: memref<8x128xf32, #tpu.memory_space<vmem>>) attributes {dimension_semantics = [#tpu.dimension_semantics<parallel>], iteration_bounds = array<i64: 1>, scalar_prefetch = 0 : i64, scratch_operands = 0 : i64, tpu.core_type = #tpu.core_type<tc>, window_params = [{transform_indices = @transform_0, window_bounds = array<i64: 8, 53>}, {pipeline_mode = #tpu.pipeline_mode<synchronous>, transform_indices = @transform_1, window_bounds = array<i64: 53, 128>}, {pipeline_mode = #tpu.pipeline_mode<synchronous>, transform_indices = @transform_2, window_bounds = array<i64: 1, 128>}, {pipeline_mode = #tpu.pipeline_mode<synchronous>, transform_indices = @transform_3, window_bounds = array<i64: 128, 53>}, {pipeline_mode = #tpu.pipeline_mode<synchronous>, transform_indices = @transform_4, window_bounds = array<i64: 1, 53>}, {transform_indices = @transform_5, window_bounds = array<i64: 8, 53>}, {transform_indices = @transform_6, window_bounds = array<i64: 8, 128>}]} {
    %c0 = arith.constant 0 : index
    %c0_0 = arith.constant 0 : index
    %0 = vector.load %arg1[%c0, %c0_0] : memref<8x53xf32, #tpu.memory_space<vmem>>, vector<8x53xf32>
    %c0_1 = arith.constant 0 : index
    %c0_2 = arith.constant 0 : index
    %1 = vector.load %arg2[%c0_1, %c0_2] : memref<53x128xf32, #tpu.memory_space<vmem>>, vector<53x128xf32>
    %cst = arith.constant dense<0.000000e+00> : vector<8x128xf32>
    %2 = tpu.matmul %0, %1, %cst {dimension_numbers = #tpu.dot_dimension_numbers<[1], [0], [0], [1], [0, 0, 1, 1], [], []>} : vector<8x53xf32>, vector<53x128xf32>, vector<8x128xf32> -> vector<8x128xf32>
    %c0_3 = arith.constant 0 : index
    %c0_4 = arith.constant 0 : index
    %3 = vector.load %arg3[%c0_3, %c0_4] : memref<1x128xf32, #tpu.memory_space<vmem>>, vector<1x128xf32>
    %4 = vector.broadcast %3 : vector<1x128xf32> to vector<8x128xf32>
    %5 = arith.addf %2, %4 : vector<8x128xf32>
    %cst_5 = arith.constant 0.000000e+00 : f32
    %6 = vector.broadcast %cst_5 : f32 to vector<8x128xf32>
    %7 = arith.maximumf %5, %6 : vector<8x128xf32>
    %c0_6 = arith.constant 0 : index
    %c0_7 = arith.constant 0 : index
    %8 = vector.load %arg7[%c0_6, %c0_7] : memref<8x128xf32, #tpu.memory_space<vmem>>, vector<8x128xf32>
    tpu.vector_store %arg7[%c0_6, %c0_7], %7 {strides = array<i32>} : memref<8x128xf32, #tpu.memory_space<vmem>>, vector<8x128xf32>,
    %c0_8 = arith.constant 0 : index
    %c0_9 = arith.constant 0 : index
    %9 = vector.load %arg4[%c0_8, %c0_9] : memref<128x53xf32, #tpu.memory_space<vmem>>, vector<128x53xf32>
    %cst_10 = arith.constant dense<0.000000e+00> : vector<8x53xf32>
    %10 = tpu.matmul %7, %9, %cst_10 {dimension_numbers = #tpu.dot_dimension_numbers<[1], [0], [0], [1], [0, 0, 1, 1], [], []>} : vector<8x128xf32>, vector<128x53xf32>, vector<8x53xf32> -> vector<8x53xf32>
    %c0_11 = arith.constant 0 : index
    %c0_12 = arith.constant 0 : index
    %11 = vector.load %arg5[%c0_11, %c0_12] : memref<1x53xf32, #tpu.memory_space<vmem>>, vector<1x53xf32>
    %12 = vector.broadcast %11 : vector<1x53xf32> to vector<8x53xf32>
    %13 = arith.addf %10, %12 : vector<8x53xf32>
    %14 = arith.negf %13 : vector<8x53xf32>
    %15 = math.exp %14 : vector<8x53xf32>
    %cst_13 = arith.constant 1.000000e+00 : f32
    %16 = vector.broadcast %cst_13 : f32 to vector<8x53xf32>
    %17 = arith.addf %16, %15 : vector<8x53xf32>
    %18 = arith.divf %16, %17 : vector<8x53xf32>
    %c0_14 = arith.constant 0 : index
    %c0_15 = arith.constant 0 : index
    %19 = vector.load %arg6[%c0_14, %c0_15] : memref<8x53xf32, #tpu.memory_space<vmem>>, vector<8x53xf32>
    tpu.vector_store %arg6[%c0_14, %c0_15], %18 {strides = array<i32>} : memref<8x53xf32, #tpu.memory_space<vmem>>, vector<8x53xf32>,
    return
  }
  func.func @transform_0(%arg0: i32) -> (i32, i32) {
    %c0_i32 = arith.constant 0 : i32
    %c0_i32_0 = arith.constant 0 : i32
    return %arg0, %c0_i32 : i32, i32
  }
  func.func @transform_1(%arg0: i32) -> (i32, i32) {
    %c0_i32 = arith.constant 0 : i32
    %c0_i32_0 = arith.constant 0 : i32
    %c0_i32_1 = arith.constant 0 : i32
    return %c0_i32, %c0_i32_0 : i32, i32
  }
  func.func @transform_2(%arg0: i32) -> (i32, i32) {
    %c0_i32 = arith.constant 0 : i32
    %c0_i32_0 = arith.constant 0 : i32
    %c0_i32_1 = arith.constant 0 : i32
    return %c0_i32, %c0_i32_0 : i32, i32
  }
  func.func @transform_3(%arg0: i32) -> (i32, i32) {
    %c0_i32 = arith.constant 0 : i32
    %c0_i32_0 = arith.constant 0 : i32
    %c0_i32_1 = arith.constant 0 : i32
    return %c0_i32, %c0_i32_0 : i32, i32
  }
  func.func @transform_4(%arg0: i32) -> (i32, i32) {
    %c0_i32 = arith.constant 0 : i32
    %c0_i32_0 = arith.constant 0 : i32
    %c0_i32_1 = arith.constant 0 : i32
    return %c0_i32, %c0_i32_0 : i32, i32
  }
  func.func @transform_5(%arg0: i32) -> (i32, i32) {
    %c0_i32 = arith.constant 0 : i32
    %c0_i32_0 = arith.constant 0 : i32
    return %arg0, %c0_i32 : i32, i32
  }
  func.func @transform_6(%arg0: i32) -> (i32, i32) {
    %c0_i32 = arith.constant 0 : i32
    %c0_i32_0 = arith.constant 0 : i32
    return %arg0, %c0_i32 : i32, i32
  }
}

</mosaic_0001>

<llo_original>
// kernel: autoencoder_forward.1
$region0: #{autoencoder_forward.1}
  #allocation0 [shape = 'u32[]', space=smem, size = 0x4, offset = 0x4, fixed_abs, tag = 'smem constant byte address 0x4 - core index']
  #allocation1 [shape = 'u32[144,128]{1,0:T(1,128)}', space=vmem, size = 0x12000, scoped, tag = 'internal scratch']
  %s0 = inlined_call_operand.vmem [shape: f32[8,53], index: 0, kind: input, shape index: {}]
  %s1 = inlined_call_operand.vmem [shape: f32[53,128], index: 1, kind: input, shape index: {}]
  %s2 = inlined_call_operand.vmem [shape: f32[1,128], index: 2, kind: input, shape index: {}]
  %s3 = inlined_call_operand.vmem [shape: f32[128,53], index: 3, kind: input, shape index: {}]
  %s4 = inlined_call_operand.vmem [shape: f32[1,53], index: 4, kind: input, shape index: {}]
  %s5 = inlined_call_operand.hbm [shape: f32[8,53], index: 5, kind: output, shape index: {0}]
  %s6 = inlined_call_operand.hbm [shape: f32[8,128], index: 6, kind: output, shape index: {1}]
  %7 = xla_tuple %s5, %s6
  %s8 = sld [smem:[#allocation0]]
  $region38: #{autoencoder_forward.1} parent=0
    _
  %s10 = ssub.s32 1, %s8
  %s11 = scalar_select 0, %s10, %s8
  $region1: #{autoencoder_forward.1} parent=0
    #allocation2 [shape = 'u8[4096]{0}', space=vmem, size = 0x1000, scoped, tag = 'output window, operand 0, single buffered']
    #allocation3 [shape = 's32[1]{0}', space=sflag, size = 0x4, scoped, tag = 'scoped memory for autoencoder_forward.1']
    #allocation4 [shape = 'u8[4096]{0}', space=vmem, size = 0x1000, scoped, tag = 'output window, operand 1, single buffered']
    #allocation5 [shape = 's32[1]{0}', space=sflag, size = 0x4, scoped, tag = 'scoped memory for autoencoder_forward.1']
    %12 = vsyncpa [#allocation3], 0
    %13 = vsyncpa [#allocation5], 0
    // Predicated region
    $region2: #{autoencoder_forward.1} parent=1 // pred_check
      _
    $region3: #{autoencoder_forward.1} parent=1 // pred_check_branch
      %15 = sbr.rel (0) target = $region5
    $region4: #{autoencoder_forward.1} parent=1 // pred_region
      _
    $region5: #{autoencoder_forward.1} parent=1 // pred_fallthru
      _
    // Predicated region
    $region6: #{autoencoder_forward.1} parent=1 // pred_check
      _
    $region7: #{autoencoder_forward.1} parent=1 // pred_check_branch
      %17 = sbr.rel (0) target = $region9
    $region8: #{autoencoder_forward.1} parent=1 // pred_region
      _
    $region9: #{autoencoder_forward.1} parent=1 // pred_fallthru
      _
    // Predicated region
    $region10: #{autoencoder_forward.1} parent=1 // pred_check
      _
    $region11: #{autoencoder_forward.1} parent=1 // pred_check_branch
      %19 = sbr.rel (0) target = $region13
    $region12: #{autoencoder_forward.1} parent=1 // pred_region
      _
    $region13: #{autoencoder_forward.1} parent=1 // pred_fallthru
      _
    // Predicated region
    $region14: #{autoencoder_forward.1} parent=1 // pred_check
      _
    $region15: #{autoencoder_forward.1} parent=1 // pred_check_branch
      %21 = sbr.rel (0) target = $region17
    $region16: #{autoencoder_forward.1} parent=1 // pred_region
      _
    $region17: #{autoencoder_forward.1} parent=1 // pred_fallthru
      _
    // Predicated region
    $region18: #{autoencoder_forward.1} parent=1 // pred_check
      _
    $region19: #{autoencoder_forward.1} parent=1 // pred_check_branch
      %23 = sbr.rel (0) target = $region21
    $region20: #{autoencoder_forward.1} parent=1 // pred_region
      _
    $region21: #{autoencoder_forward.1} parent=1 // pred_fallthru
      _
    %v24 = vld [vmem:[%s0] sm:$0xff]
    %v25 = vld [vmem:[%s1] sm:$0xff]
    %v26 = vld [vmem:[%s1 + $0x8] sm:$0xff]
    %v27 = vld [vmem:[%s1 + $0x10] sm:$0xff]
    %v28 = vld [vmem:[%s1 + $0x18] sm:$0xff]
    %v29 = vld [vmem:[%s1 + $0x20] sm:$0xff]
    %v30 = vld [vmem:[%s1 + $0x28] sm:$0xff]
    %v31 = vld [vmem:[%s1 + $0x30] sm:$0x1f]
    %v32 = vld [vmem:[%s2] sm:$0x1]
    %v34 = vlaneseq
    %v35 = vshrl.u32 %v34, 7
    %v36 = vsub.s32 0, %v35
    %v37 = vrot.slane %v32, %v36
    %vm39 = vcmask 433152
    %v41 = vsel %vm39, %v24, 0
    %vm43 = vcmask 1044480
    %v45 = vsel %vm43, %v31, 0
    %47 = vmatprep.subr.mxu0 0.0
    %48 = vmatpush1.msra.mxu0 0.0
    %49 = vmatprep.subr.mxu0 0.0
    %50 = vmatpush1.msra.mxu0 0.0
    %51 = vmatprep.subr.mxu0 0.0
    %52 = vmatpush1.msra.mxu0 0.0
    %53 = vmatprep.subr.mxu0 0.0
    %54 = vmatpush1.msra.mxu0 0.0
    %55 = vmatprep.subr.mxu0 0.0
    %56 = vmatpush1.msra.mxu0 0.0
    %57 = vmatprep.subr.mxu0 0.0
    %58 = vmatpush1.msra.mxu0 0.0
    %59 = vmatprep.subr.mxu0 0.0
    %60 = vmatpush1.msra.mxu0 0.0
    %61 = vmatprep.subr.mxu0 0.0
    %62 = vmatpush1.msra.mxu0 0.0
    %63 = vmatprep.subr.mxu0 0.0
    %64 = vmatpush1.msra.mxu0 0.0
    %65 = vmatprep.subr.mxu0 0.0
    %66 = vmatpush1.msra.mxu0 %v45
    %67 = vmatprep.subr.mxu0 0.0
    %68 = vmatpush1.msra.mxu0 %v30
    %69 = vmatprep.subr.mxu0 0.0
    %70 = vmatpush1.msra.mxu0 %v29
    %71 = vmatprep.subr.mxu0 0.0
    %72 = vmatpush1.msra.mxu0 %v28
    %73 = vmatprep.subr.mxu0 0.0
    %74 = vmatpush1.msra.mxu0 %v27
    %75 = vmatprep.subr.mxu0 0.0
    %76 = vmatpush1.msra.mxu0 %v26
    %77 = vmatprep.subr.mxu0 0.0
    %78 = vmatpush1.msra.mxu0 %v25
    %79 = vmatprep.subr.mxu0 0.0
    %80 = vmatpush2.msra.mxu0 0.0
    %81 = vmatprep.subr.mxu0 0.0
    %82 = vmatpush2.msra.mxu0 0.0
    %83 = vmatprep.subr.mxu0 0.0
    %84 = vmatpush2.msra.mxu0 0.0
    %85 = vmatprep.subr.mxu0 0.0
    %86 = vmatpush2.msra.mxu0 0.0
    %87 = vmatprep.subr.mxu0 0.0
    %88 = vmatpush2.msra.mxu0 0.0
    %89 = vmatprep.subr.mxu0 0.0
    %90 = vmatpush2.msra.mxu0 0.0
    %91 = vmatprep.subr.mxu0 0.0
    %92 = vmatpush2.msra.mxu0 0.0
    %93 = vmatprep.subr.mxu0 0.0
    %94 = vmatpush2.msra.mxu0 0.0
    %95 = vmatprep.subr.mxu0 0.0
    %96 = vmatpush2.msra.mxu0 0.0
    %97 = vmatprep.subr.mxu0 0.0
    %98 = vmatpush2.msra.mxu0 0.0
    %99 = vmatprep.subr.mxu0 0.0
    %100 = vmatpush2.msra.mxu0 0.0
    %101 = vmatprep.subr.mxu0 0.0
    %102 = vmatpush2.msra.mxu0 0.0
    %103 = vmatprep.subr.mxu0 0.0
    %104 = vmatpush2.msra.mxu0 0.0
    %105 = vmatprep.subr.mxu0 0.0
    %106 = vmatpush2.msra.mxu0 0.0
    %107 = vmatprep.subr.mxu0 0.0
    %108 = vmatpush2.msra.mxu0 0.0
    %109 = vmatprep.subr.mxu0 0.0
    %110 = vmatpush2.msra.mxu0 0.0
    %111 = vmatprep.mubr.f32.mxu0 0.0
    %112 = vmatmul.mubr.f32.gmra.mxu0 %v41
    %v113 = vpop.f32.mrf.mxu0
    %v114 = vadd.f32 %v37, %v113
    %v115 = vpop.f32.mrf.mxu0
    %116 = vdwg.mxu0
    %v117 = vmax.f32 %v114, 0.0
    %118 = vst [vmem:[#allocation4] sm:$0xff] %v117
    %v119 = vld [vmem:[%s3] sm:$0xff]
    %v120 = vld [vmem:[%s3 + $0x8] sm:$0xff]
    %v121 = vld [vmem:[%s3 + $0x10] sm:$0xff]
    %v122 = vld [vmem:[%s3 + $0x18] sm:$0xff]
    %v123 = vld [vmem:[%s3 + $0x20] sm:$0xff]
    %v124 = vld [vmem:[%s3 + $0x28] sm:$0xff]
    %v125 = vld [vmem:[%s3 + $0x30] sm:$0xff]
    %v126 = vld [vmem:[%s3 + $0x38] sm:$0xff]
    %v127 = vld [vmem:[%s3 + $0x40] sm:$0xff]
    %v128 = vld [vmem:[%s3 + $0x48] sm:$0xff]
    %v129 = vld [vmem:[%s3 + $0x50] sm:$0xff]
    %v130 = vld [vmem:[%s3 + $0x58] sm:$0xff]
    %v131 = vld [vmem:[%s3 + $0x60] sm:$0xff]
    %v132 = vld [vmem:[%s3 + $0x68] sm:$0xff]
    %v133 = vld [vmem:[%s3 + $0x70] sm:$0xff]
    %v134 = vld [vmem:[%s3 + $0x78] sm:$0xff]
    %v135 = vld [vmem:[%s4] sm:$0x1]
    %v137 = vlaneseq
    %v138 = vshrl.u32 %v137, 7
    %v139 = vsub.s32 0, %v138
    %v140 = vrot.slane %v135, %v139
    %142 = vmatprep.subr.mxu0 0.0
    %143 = vmatpush1.msra.mxu0 %v134
    %144 = vmatprep.subr.mxu0 0.0
    %145 = vmatpush1.msra.mxu0 %v133
    %146 = vmatprep.subr.mxu0 0.0
    %147 = vmatpush1.msra.mxu0 %v132
    %148 = vmatprep.subr.mxu0 0.0
    %149 = vmatpush1.msra.mxu0 %v131
    %150 = vmatprep.subr.mxu0 0.0
    %151 = vmatpush1.msra.mxu0 %v130
    %152 = vmatprep.subr.mxu0 0.0
    %153 = vmatpush1.msra.mxu0 %v129
    %154 = vmatprep.subr.mxu0 0.0
    %155 = vmatpush1.msra.mxu0 %v128
    %156 = vmatprep.subr.mxu0 0.0
    %157 = vmatpush1.msra.mxu0 %v127
    %158 = vmatprep.subr.mxu0 0.0
    %159 = vmatpush1.msra.mxu0 %v126
    %160 = vmatprep.subr.mxu0 0.0
    %161 = vmatpush1.msra.mxu0 %v125
    %162 = vmatprep.subr.mxu0 0.0
    %163 = vmatpush1.msra.mxu0 %v124
    %164 = vmatprep.subr.mxu0 0.0
    %165 = vmatpush1.msra.mxu0 %v123
    %166 = vmatprep.subr.mxu0 0.0
    %167 = vmatpush1.msra.mxu0 %v122
    %168 = vmatprep.subr.mxu0 0.0
    %169 = vmatpush1.msra.mxu0 %v121
    %170 = vmatprep.subr.mxu0 0.0
    %171 = vmatpush1.msra.mxu0 %v120
    %172 = vmatprep.subr.mxu0 0.0
    %173 = vmatpush1.msra.mxu0 %v119
    %174 = vmatprep.subr.mxu0 0.0
    %175 = vmatpush2.msra.mxu0 0.0
    %176 = vmatprep.subr.mxu0 0.0
    %177 = vmatpush2.msra.mxu0 0.0
    %178 = vmatprep.subr.mxu0 0.0
    %179 = vmatpush2.msra.mxu0 0.0
    %180 = vmatprep.subr.mxu0 0.0
    %181 = vmatpush2.msra.mxu0 0.0
    %182 = vmatprep.subr.mxu0 0.0
    %183 = vmatpush2.msra.mxu0 0.0
    %184 = vmatprep.subr.mxu0 0.0
    %185 = vmatpush2.msra.mxu0 0.0
    %186 = vmatprep.subr.mxu0 0.0
    %187 = vmatpush2.msra.mxu0 0.0
    %188 = vmatprep.subr.mxu0 0.0
    %189 = vmatpush2.msra.mxu0 0.0
    %190 = vmatprep.subr.mxu0 0.0
    %191 = vmatpush2.msra.mxu0 0.0
    %192 = vmatprep.subr.mxu0 0.0
    %193 = vmatpush2.msra.mxu0 0.0
    %194 = vmatprep.subr.mxu0 0.0
    %195 = vmatpush2.msra.mxu0 0.0
    %196 = vmatprep.subr.mxu0 0.0
    %197 = vmatpush2.msra.mxu0 0.0
    %198 = vmatprep.subr.mxu0 0.0
    %199 = vmatpush2.msra.mxu0 0.0
    %200 = vmatprep.subr.mxu0 0.0
    %201 = vmatpush2.msra.mxu0 0.0
    %202 = vmatprep.subr.mxu0 0.0
    %203 = vmatpush2.msra.mxu0 0.0
    %204 = vmatprep.subr.mxu0 0.0
    %205 = vmatpush2.msra.mxu0 0.0
    %206 = vmatprep.mubr.f32.mxu0 0.0
    %207 = vmatmul.mubr.f32.gmra.mxu0 %v117
    %v208 = vpop.f32.mrf.mxu0
    %v209 = vadd.f32 %v140, %v208
    %v210 = vpop.f32.mrf.mxu0
    %211 = vdwg.mxu0
    %v212 = vxor.u32 %v209, 2147483648
    %v213 = vmul.f32 %v212, 1.442695
    %v214 = vpow.pop %v213
    %v215 = vadd.f32 %v214, 1.0
    %v216 = vrcp.pop %v215
    %v217 = vmul.f32 1.0, %v216
    %218 = vst.msk [vmem:[#allocation2] sm:$0xff] %vm39, %v217
    // Predicated region
    $region22: #{autoencoder_forward.1} parent=1 // pred_check
      _
    $region23: #{autoencoder_forward.1} parent=1 // pred_check_branch
      %220 = sbr.rel (0) target = $region25
    $region24: #{autoencoder_forward.1} parent=1 // pred_region
      %s222 = ssub.s32 128, 128
      %223 = vsyncadd [#allocation3], %s222
      %s225 = sshll.u32 [#allocation2], 4
      %s226 = int_to_ptr.vmem [resolvable:$true] %s225
      %228 = dma.vmem_to_hbm [thread:$0]  %s226, 128, %s5, [#allocation3]
    $region25: #{autoencoder_forward.1} parent=1 // pred_fallthru
      _
    // Predicated region
    $region26: #{autoencoder_forward.1} parent=1 // pred_check
      _
    $region27: #{autoencoder_forward.1} parent=1 // pred_check_branch
      %230 = sbr.rel (0) target = $region29
    $region28: #{autoencoder_forward.1} parent=1 // pred_region
      %s232 = ssub.s32 128, 128
      %233 = vsyncadd [#allocation5], %s232
      %s235 = sshll.u32 [#allocation4], 4
      %s236 = int_to_ptr.vmem [resolvable:$true] %s235
      %238 = dma.vmem_to_hbm [thread:$0]  %s236, 128, %s6, [#allocation5]
    $region29: #{autoencoder_forward.1} parent=1 // pred_fallthru
      _
    // Predicated region
    $region30: #{autoencoder_forward.1} parent=1 // pred_check
      _
    $region31: #{autoencoder_forward.1} parent=1 // pred_check_branch
      %240 = sbr.rel (0) target = $region33
    $region32: #{autoencoder_forward.1} parent=1 // pred_region
      %241 = dma.done [#allocation3], 128
    $region33: #{autoencoder_forward.1} parent=1 // pred_fallthru
      _
    // Predicated region
    $region34: #{autoencoder_forward.1} parent=1 // pred_check
      _
    $region35: #{autoencoder_forward.1} parent=1 // pred_check_branch
      %243 = sbr.rel (0) target = $region37
    $region36: #{autoencoder_forward.1} parent=1 // pred_region
      %244 = dma.done [#allocation5], 128
    $region37: #{autoencoder_forward.1} parent=1 // pred_fallthru
      _
    %245 = vsyncpa [#allocation3], 1
    %246 = vsyncpa [#allocation5], 1

</llo_original>
